<compile_context>
chip_gen: v7x
topology: tpu7x:2x2x1
jax: 0.10.0
libtpu: 0.0.40
codegen_flags: <defaults>
</compile_context>

<pallas_src>
import functools

import jax
import jax.numpy as jnp
from jax.experimental import pallas as pl
from jax.experimental.pallas import tpu as pltpu

LANES = 128
ACC_ROWS = 8          # accumulator is one (8, 128) f32 vreg
NUM_CORES = 2         # leading "parallel" axis; shards rows across v7x's 2 TCs


def _round_up(x, m):
    return ((x + m - 1) // m) * m


def _mse_partial_kernel(x_ref, t_ref, o_ref, acc_ref, *,
                        total_rows, tile_rows, steps_per_core, need_mask):
    # x_ref, t_ref: (tile_rows, 128) tiles of the flattened tensors.
    # o_ref:        (1, 8, 128) f32 per-core partial-sum block.
    # acc_ref:      (8, 128) f32 VMEM scratch accumulator (one vreg).
    c = pl.program_id(0)   # core / row-range shard
    i = pl.program_id(1)   # step within the shard

    @pl.when(i == 0)
    def _init():
        acc_ref[...] = jnp.zeros_like(acc_ref)

    diff = x_ref[...].astype(jnp.float32) - t_ref[...].astype(jnp.float32)
    sq = diff * diff

    def _accumulate(vals):
        # Sublane-grouped vreg adds: (tile_rows,128)->(tile_rows//8,8,128) is a
        # layout-preserving regroup; sum(axis=0) is pure VPU adds into one vreg.
        acc_ref[...] += vals.reshape(tile_rows // ACC_ROWS, ACC_ROWS, LANES).sum(axis=0)

    if need_mask:
        block_id = c * steps_per_core + i
        row0 = block_id * tile_rows
        is_partial = row0 + tile_rows > total_rows

        @pl.when(is_partial)
        def _masked():  # only partial / fully-OOB logical blocks pay the mask
            row = jax.lax.broadcasted_iota(jnp.int32, sq.shape, 0) + row0
            _accumulate(jnp.where(row < total_rows, sq, 0.0))

        @pl.when(jnp.logical_not(is_partial))
        def _plain():
            _accumulate(sq)
    else:
        _accumulate(sq)

    @pl.when(i == pl.num_programs(1) - 1)
    def _finalize():
        o_ref[...] = acc_ref[...].reshape(1, ACC_ROWS, LANES)


def content_loss_forward(x, target, *, tile_rows=8192, min_pallas_elems=1 << 20):
    """Returns (input_passthrough, mse_loss_scalar) — mirrors ContentLoss.forward
    (which stores the loss on self.loss and returns the input unchanged)."""
    assert x.shape == target.shape, "mse_loss requires matching shapes here"
    n_elem = x.size

    # Small-input fast path: pallas_call launch + pipeline prologue dominate;
    # XLA fuses the tiny MSE into a single pass.
    if n_elem < min_pallas_elems:
        d = x.astype(jnp.float32) - target.astype(jnp.float32)
        return x, jnp.mean(d * d)

    xf = x.reshape(-1)
    tf = target.reshape(-1)

    rows = n_elem // LANES
    if n_elem % LANES == 0:
        x_main, t_main = xf, tf
        tail_sq = jnp.float32(0.0)
    else:
        # Reduce the (<128-element) tail in plain JAX instead of jnp.pad, which
        # would materialize a padded copy of BOTH tensors (~2x HBM traffic).
        split = rows * LANES
        dt = xf[split:].astype(jnp.float32) - tf[split:].astype(jnp.float32)
        tail_sq = jnp.sum(dt * dt)
        # TODO(synk): the aligned-prefix slice below still materializes a copy
        # when n_elem % 128 != 0; acceptable since conv feature maps are
        # essentially always 128-aligned.
        x_main, t_main = xf[:split], tf[:split]

    if rows == 0:
        return x, tail_sq / jnp.float32(n_elem)

    x2d = x_main.reshape(rows, LANES)
    t2d = t_main.reshape(rows, LANES)

    # dtype-aware sublane minimum for the second-to-last block dim.
    min_rows = {4: 8, 2: 16, 1: 32}.get(jnp.dtype(x.dtype).itemsize, 8)
    tile_rows = max(min_rows, min(tile_rows, _round_up(rows, min_rows)))
    tile_rows = _round_up(tile_rows, min_rows)

    n_blocks = pl.cdiv(rows, tile_rows)
    steps = pl.cdiv(n_blocks, NUM_CORES)
    need_mask = (rows % tile_rows != 0) or (n_blocks % NUM_CORES != 0)

    def in_map(c, i):
        # Clamp so every auto-DMA stays in-bounds; fully-OOB logical blocks are
        # zero-masked in the kernel, so the duplicated data is never counted.
        return (jnp.minimum(c * steps + i, n_blocks - 1), 0)

    kernel = functools.partial(
        _mse_partial_kernel,
        total_rows=rows,
        tile_rows=tile_rows,
        steps_per_core=steps,
        need_mask=need_mask,
    )

    partials = pl.pallas_call(
        kernel,
        out_shape=jax.ShapeDtypeStruct((NUM_CORES, ACC_ROWS, LANES), jnp.float32),
        grid_spec=pltpu.PrefetchScalarGridSpec(
            num_scalar_prefetch=0,
            grid=(NUM_CORES, steps),
            in_specs=[
                pl.BlockSpec((tile_rows, LANES), in_map),
                pl.BlockSpec((tile_rows, LANES), in_map),
            ],
            out_specs=pl.BlockSpec((1, ACC_ROWS, LANES), lambda c, i: (c, 0, 0)),
            scratch_shapes=[pltpu.VMEM((ACC_ROWS, LANES), jnp.float32)],
        ),
        compiler_params=pltpu.CompilerParams(
            dimension_semantics=("parallel", "arbitrary"),
            vmem_limit_bytes=32 * 1024 * 1024,  # explicit for v5e's 16 MiB default
        ),
    )(x2d, t2d)

    loss = (jnp.sum(partials) + tail_sq) / jnp.float32(n_elem)
    return x, loss


class ContentLoss:
    """Mirrors the PyTorch module: forward(input) stores self.loss, returns input."""

    def __init__(self, target):
        self.target = jax.lax.stop_gradient(target)  # ~ target.detach()
        self.loss = None

    def __call__(self, x):
        out, self.loss = content_loss_forward(x, self.target)
        return out


if __name__ == "__main__":
    key = jax.random.PRNGKey(0)
    k1, k2, k3, k4, k5, k6 = jax.random.split(key, 6)

    def ref_mse(a, b):
        d = a.astype(jnp.float32) - b.astype(jnp.float32)
        return jnp.mean(d * d)

    # 1) Small NCHW feature map (module-typical shape) through the module wrapper.
    x = jax.random.normal(k1, (2, 4, 16, 16), dtype=jnp.float32)
    t = jax.random.normal(k2, (2, 4, 16, 16), dtype=jnp.float32)
    m = ContentLoss(t)
    out = jax.block_until_ready(m(x))
    loss = jax.block_until_ready(m.loss)
    assert jnp.array_equal(out, x)                       # forward returns input
    assert jnp.allclose(loss, ref_mse(x, t), rtol=1e-5, atol=1e-6), (loss, ref_mse(x, t))

    # 2) Same small input with the Pallas path forced (exercises the kernel).
    _, loss_k = content_loss_forward(x, t, min_pallas_elems=0)
    loss_k = jax.block_until_ready(loss_k)
    assert jnp.allclose(loss_k, ref_mse(x, t), rtol=1e-5, atol=1e-6), (loss_k, ref_mse(x, t))

    # 3) Misaligned (size % 128 != 0) f32 input through the kernel + tail path.
    x3 = jax.random.normal(k3, (3, 5, 33, 37), dtype=jnp.float32)
    t3 = jax.random.normal(k4, (3, 5, 33, 37), dtype=jnp.float32)
    _, loss3 = content_loss_forward(x3, t3, min_pallas_elems=0)
    loss3 = jax.block_until_ready(loss3)
    assert jnp.allclose(loss3, ref_mse(x3, t3), rtol=1e-5, atol=1e-6), (loss3, ref_mse(x3, t3))

    # 4) bf16 feature map through the kernel (dtype-aware sublane clamp path).
    x4 = jax.random.normal(k5, (2, 8, 32, 32), dtype=jnp.bfloat16)
    t4 = jax.random.normal(k6, (2, 8, 32, 32), dtype=jnp.bfloat16)
    _, loss4 = content_loss_forward(x4, t4, min_pallas_elems=0)
    loss4 = jax.block_until_ready(loss4)
    assert jnp.allclose(loss4, ref_mse(x4, t4), rtol=1e-4, atol=1e-5), (loss4, ref_mse(x4, t4))

    print("KERNEL_OK")
</pallas_src>

<mosaic_0001>
module attributes {stable_mosaic.version = 11 : i64} {
  func.func @_mse_partial_kernel(%arg0: i32, %arg1: i32, %arg2: memref<16x128xf32, #tpu.memory_space<vmem>>, %arg3: memref<16x128xf32, #tpu.memory_space<vmem>>, %arg4: memref<1x8x128xf32, #tpu.memory_space<vmem>>, %arg5: memref<8x128xf32, #tpu.memory_space<vmem>>) attributes {dimension_semantics = [#tpu.dimension_semantics<parallel>, #tpu.dimension_semantics<arbitrary>], iteration_bounds = array<i64: 2, 1>, scalar_prefetch = 0 : i64, scratch_operands = 1 : i64, tpu.core_type = #tpu.core_type<tc>, window_params = [{transform_indices = @transform_0, window_bounds = array<i64: 16, 128>}, {transform_indices = @transform_1, window_bounds = array<i64: 16, 128>}, {transform_indices = @transform_2, window_bounds = array<i64: 1, 8, 128>}]} {
    %c0_i32 = arith.constant 0 : i32
    %0 = arith.cmpi eq, %arg1, %c0_i32 : i32
    %1 = arith.extui %0 : i1 to i32
    %c0_i32_0 = arith.constant 0 : i32
    %2 = arith.cmpi ne, %1, %c0_i32_0 : i32
    scf.if %2 {
      %cst = arith.constant 0.000000e+00 : f32
      %20 = vector.broadcast %cst : f32 to vector<8x128xf32>
      %c0_10 = arith.constant 0 : index
      %c0_11 = arith.constant 0 : index
      %21 = vector.load %arg5[%c0_10, %c0_11] : memref<8x128xf32, #tpu.memory_space<vmem>>, vector<8x128xf32>
      tpu.vector_store %arg5[%c0_10, %c0_11], %20 {strides = array<i32>} : memref<8x128xf32, #tpu.memory_space<vmem>>, vector<8x128xf32>,
    } else {
    }
    %c0 = arith.constant 0 : index
    %c0_1 = arith.constant 0 : index
    %3 = vector.load %arg2[%c0, %c0_1] : memref<16x128xf32, #tpu.memory_space<vmem>>, vector<16x128xf32>
    %c0_2 = arith.constant 0 : index
    %c0_3 = arith.constant 0 : index
    %4 = vector.load %arg3[%c0_2, %c0_3] : memref<16x128xf32, #tpu.memory_space<vmem>>, vector<16x128xf32>
    %5 = arith.subf %3, %4 : vector<16x128xf32>
    %6 = arith.mulf %5, %5 : vector<16x128xf32>
    %c1_i32 = arith.constant 1 : i32
    %7 = arith.muli %arg0, %c1_i32 : i32
    %8 = arith.addi %7, %arg1 : i32
    %c16_i32 = arith.constant 16 : i32
    %9 = arith.muli %8, %c16_i32 : i32
    %c16_i32_4 = arith.constant 16 : i32
    %10 = arith.addi %9, %c16_i32_4 : i32
    %c16_i32_5 = arith.constant 16 : i32
    %11 = arith.cmpi sgt, %10, %c16_i32_5 : i32
    %12 = arith.extui %11 : i1 to i32
    %c0_i32_6 = arith.constant 0 : i32
    %13 = arith.cmpi ne, %12, %c0_i32_6 : i32
    scf.if %13 {
      %20 = tpu.iota {dimensions = array<i32: 0>} : vector<16x128xi32>
      %21 = vector.broadcast %9 : i32 to vector<16x128xi32>
      %22 = arith.addi %20, %21 : vector<16x128xi32>
      %c16_i32_10 = arith.constant 16 : i32
      %23 = vector.broadcast %c16_i32_10 : i32 to vector<16x128xi32>
      %24 = arith.cmpi slt, %22, %23 : vector<16x128xi32>
      %cst = arith.constant 0.000000e+00 : f32
      %25 = vector.broadcast %cst : f32 to vector<16x128xf32>
      %26 = arith.select %24, %6, %25 : vector<16x128xi1>, vector<16x128xf32>
      %c0_11 = arith.constant 0 : index
      %c0_12 = arith.constant 0 : index
      %27 = vector.load %arg5[%c0_11, %c0_12] : memref<8x128xf32, #tpu.memory_space<vmem>>, vector<8x128xf32>
      %28 = vector.shape_cast %26 : vector<16x128xf32> to vector<2x8x128xf32>
      %cst_13 = arith.constant dense<0.000000e+00> : vector<8x128xf32>
      %29 = vector.multi_reduction <add>, %28, %cst_13 [0] : vector<2x8x128xf32> to vector<8x128xf32>
      %30 = arith.addf %27, %29 : vector<8x128xf32>
      %c0_14 = arith.constant 0 : index
      %c0_15 = arith.constant 0 : index
      %31 = vector.load %arg5[%c0_14, %c0_15] : memref<8x128xf32, #tpu.memory_space<vmem>>, vector<8x128xf32>
      tpu.vector_store %arg5[%c0_14, %c0_15], %30 {strides = array<i32>} : memref<8x128xf32, #tpu.memory_space<vmem>>, vector<8x128xf32>,
    } else {
    }
    %true = arith.constant true
    %14 = arith.xori %11, %true : i1
    %15 = arith.extui %14 : i1 to i32
    %c0_i32_7 = arith.constant 0 : i32
    %16 = arith.cmpi ne, %15, %c0_i32_7 : i32
    scf.if %16 {
      %c0_10 = arith.constant 0 : index
      %c0_11 = arith.constant 0 : index
      %20 = vector.load %arg5[%c0_10, %c0_11] : memref<8x128xf32, #tpu.memory_space<vmem>>, vector<8x128xf32>
      %21 = vector.shape_cast %6 : vector<16x128xf32> to vector<2x8x128xf32>
      %cst = arith.constant dense<0.000000e+00> : vector<8x128xf32>
      %22 = vector.multi_reduction <add>, %21, %cst [0] : vector<2x8x128xf32> to vector<8x128xf32>
      %23 = arith.addf %20, %22 : vector<8x128xf32>
      %c0_12 = arith.constant 0 : index
      %c0_13 = arith.constant 0 : index
      %24 = vector.load %arg5[%c0_12, %c0_13] : memref<8x128xf32, #tpu.memory_space<vmem>>, vector<8x128xf32>
      tpu.vector_store %arg5[%c0_12, %c0_13], %23 {strides = array<i32>} : memref<8x128xf32, #tpu.memory_space<vmem>>, vector<8x128xf32>,
    } else {
    }
    %c0_i32_8 = arith.constant 0 : i32
    %17 = arith.cmpi eq, %arg1, %c0_i32_8 : i32
    %18 = arith.extui %17 : i1 to i32
    %c0_i32_9 = arith.constant 0 : i32
    %19 = arith.cmpi ne, %18, %c0_i32_9 : i32
    scf.if %19 {
      %c0_10 = arith.constant 0 : index
      %c0_11 = arith.constant 0 : index
      %20 = vector.load %arg5[%c0_10, %c0_11] : memref<8x128xf32, #tpu.memory_space<vmem>>, vector<8x128xf32>
      %21 = vector.shape_cast %20 : vector<8x128xf32> to vector<1x8x128xf32>
      %c0_12 = arith.constant 0 : index
      %c0_13 = arith.constant 0 : index
      %c0_14 = arith.constant 0 : index
      %22 = vector.load %arg4[%c0_12, %c0_13, %c0_14] : memref<1x8x128xf32, #tpu.memory_space<vmem>>, vector<1x8x128xf32>
      tpu.vector_store %arg4[%c0_12, %c0_13, %c0_14], %21 {strides = array<i32>} : memref<1x8x128xf32, #tpu.memory_space<vmem>>, vector<1x8x128xf32>,
    } else {
    }
    return
  }
  func.func @transform_0(%arg0: i32, %arg1: i32) -> (i32, i32) {
    %c1_i32 = arith.constant 1 : i32
    %0 = arith.muli %arg0, %c1_i32 : i32
    %1 = arith.addi %0, %arg1 : i32
    %c0_i32 = arith.constant 0 : i32
    %2 = arith.minsi %1, %c0_i32 : i32
    %c0_i32_0 = arith.constant 0 : i32
    %c0_i32_1 = arith.constant 0 : i32
    return %2, %c0_i32_0 : i32, i32
  }
  func.func @transform_1(%arg0: i32, %arg1: i32) -> (i32, i32) {
    %c1_i32 = arith.constant 1 : i32
    %0 = arith.muli %arg0, %c1_i32 : i32
    %1 = arith.addi %0, %arg1 : i32
    %c0_i32 = arith.constant 0 : i32
    %2 = arith.minsi %1, %c0_i32 : i32
    %c0_i32_0 = arith.constant 0 : i32
    %c0_i32_1 = arith.constant 0 : i32
    return %2, %c0_i32_0 : i32, i32
  }
  func.func @transform_2(%arg0: i32, %arg1: i32) -> (i32, i32, i32) {
    %c0_i32 = arith.constant 0 : i32
    %c0_i32_0 = arith.constant 0 : i32
    %c0_i32_1 = arith.constant 0 : i32
    return %arg0, %c0_i32, %c0_i32_0 : i32, i32, i32
  }
}

</mosaic_0001>

<llo_original>
// kernel: tpu_custom_call.1
$region0: #{tpu_custom_call.1}
  #allocation0 [shape = 'u32[]', space=smem, size = 0x4, offset = 0x4, fixed_abs, tag = 'smem constant byte address 0x4 - core index']
  #allocation1 [shape = 'u32[144,128]{1,0:T(1,128)}', space=vmem, size = 0x12000, scoped, tag = 'internal scratch']
  #allocation2 [shape = 'f32[8,128]{1,0:T(8,128)}', space=vmem, size = 0x1000, scoped, tag = 'scratch operand']
  %s0 = inlined_call_operand.hbm [shape: f32[16,128], index: 0, kind: input, shape index: {}]
  %s1 = inlined_call_operand.hbm [shape: f32[16,128], index: 1, kind: input, shape index: {}]
  %s2 = inlined_call_operand.hbm [shape: f32[2,8,128], index: 2, kind: output, shape index: {}]
  %s3 = sld [smem:[#allocation0]]
  $region65: #{tpu_custom_call.1} parent=0
    _
  %s5 = ssub.s32 1, %s3
  %s6 = scalar_select 0, %s5, %s3
  $region1: #{tpu_custom_call.1} parent=0
    #allocation3 [shape = 'u8[16384]{0}', space=vmem, size = 0x4000, scoped, tag = 'input window, operand 0']
    #allocation4 [shape = 's32[2]{0}', space=sflag, size = 0x8, scoped, tag = 'scoped memory for tpu_custom_call.1']
    #allocation5 [shape = 's32[2]{0}', space=sflag, size = 0x8, scoped, tag = 'scoped memory for tpu_custom_call.1']
    #allocation6 [shape = 'u8[16384]{0}', space=vmem, size = 0x4000, scoped, tag = 'input window, operand 1']
    #allocation7 [shape = 's32[2]{0}', space=sflag, size = 0x8, scoped, tag = 'scoped memory for tpu_custom_call.1']
    #allocation8 [shape = 'u8[8192]{0}', space=vmem, size = 0x2000, scoped, tag = 'output window, operand 0']
    %7 = vsyncpa [#allocation4], 0
    %s8 = scalar_lea.sflag [#allocation4], 1
    %9 = vsyncpa %s8, 0
    %10 = vsyncpa [#allocation7], 0
    %s11 = scalar_lea.sflag [#allocation7], 1
    %12 = vsyncpa %s11, 0
    %13 = vsyncpa [#allocation5], 0
    %s14 = scalar_lea.sflag [#allocation5], 1
    %15 = vsyncpa %s14, 0
    loop: start=0, step=1, limit=4
    $region2: #{tpu_custom_call.1} parent=1 // loop_pre_header
      _
    $region3: #{tpu_custom_call.1} parent=1 // loop_header
      %s17 = sphi 0, %s21
      %p18 = scmp.ge.s32.totalorder %s17, 4
      %s24 = sphi 0, %s36
      %s25 = sphi 0, %s32
      %s26 = sphi 0, %s24
      %s27 = sphi 0, %s25
      %s28 = sphi 0, %s26
      %s29 = sphi 0, %s27
      %s45 = sphi 0, %s47
      %s48 = sphi 0, %s45
      %s49 = sphi 0, %s48
      %s65 = sphi 0, %s49
      %s77 = sphi 0, %s79
      %s80 = sphi 0, %s77
      %s81 = sphi 0, %s80
      %s97 = sphi 0, %s81
      %s103 = sphi 0, %s105
      %s106 = sphi 0, %s103
      %s107 = sphi 0, %s106
      %s123 = sphi 0, %s107
    $region4: #{tpu_custom_call.1} parent=1 // loop_header_branch
      %20 = sbr.rel (%p18) target = $region8
    $region5: #{tpu_custom_call.1} parent=1 // loop_body
      %s22 = ssub.s32 %s17, 1
      %s23 = ssub.s32 %s17, 2
      %s30 = sadd.s32 1, %s25
      %p31 = scmp.ge.s32.totalorder %s30, 1
      %s32 = scalar_select %p31, 0, %s30
      %s33 = sadd.s32 1, %s24
      %s34 = scalar_select %p31, %s33, %s24
      %p35 = scmp.ge.s32.totalorder %s34, 2
      %s36 = scalar_select %p35, 0, %s34
      %s37 = sadd.s32 %s24, %s25
      %p38 = scmp.lt.s32.totalorder %s37, 0
      %s39 = scalar_select %p38, %s37, 0
      %s40 = sadd.s32 %s36, %s32
      %p41 = scmp.lt.s32.totalorder %s40, 0
      %s42 = scalar_select %p41, %s40, 0
      %s43 = ssub.s32 %s39, %s42
      %p44 = scmp.eq.s32.totalorder %s43, 0
      %s46 = sadd.s32 %s45, 1
      %s47 = scalar_select %p44, %s45, %s46
      %p50 = pneg %p44
      %p51 = scmp.eq.s32.totalorder %s17, 1
      %p52 = por %p50, %p51
      %p53 = scmp.ne.s32.totalorder %s45, %s48
      %p54 = scmp.eq.s32.totalorder %s17, 0
      %p55 = por %p53, %p54
      %p56 = scmp.ne.s32.totalorder %s45, %s48
      %p57 = scmp.eq.s32.totalorder %s22, 1
      %p58 = por %p56, %p57
      %p59 = scmp.ne.s32.totalorder %s48, %s49
      %p60 = scmp.eq.s32.totalorder %s22, 0
      %p61 = por %p59, %p60
      %p62 = scmp.ne.s32.totalorder %s48, %s49
      %p63 = scmp.eq.s32.totalorder %s23, 1
      %p64 = por %p62, %p63
      %p66 = scmp.ne.s32.totalorder %s49, %s65
      %p67 = scmp.eq.s32.totalorder %s23, 0
      %p68 = por %p66, %p67
      %s69 = sadd.s32 %s24, %s25
      %p70 = scmp.lt.s32.totalorder %s69, 0
      %s71 = scalar_select %p70, %s69, 0
      %s72 = sadd.s32 %s36, %s32
      %p73 = scmp.lt.s32.totalorder %s72, 0
      %s74 = scalar_select %p73, %s72, 0
      %s75 = ssub.s32 %s71, %s74
      %p76 = scmp.eq.s32.totalorder %s75, 0
      %s78 = sadd.s32 %s77, 1
      %s79 = scalar_select %p76, %s77, %s78
      %p82 = pneg %p76
      %p83 = scmp.eq.s32.totalorder %s17, 1
      %p84 = por %p82, %p83
      %p85 = scmp.ne.s32.totalorder %s77, %s80
      %p86 = scmp.eq.s32.totalorder %s17, 0
      %p87 = por %p85, %p86
      %p88 = scmp.ne.s32.totalorder %s77, %s80
      %p89 = scmp.eq.s32.totalorder %s22, 1
      %p90 = por %p88, %p89
      %p91 = scmp.ne.s32.totalorder %s80, %s81
      %p92 = scmp.eq.s32.totalorder %s22, 0
      %p93 = por %p91, %p92
      %p94 = scmp.ne.s32.totalorder %s80, %s81
      %p95 = scmp.eq.s32.totalorder %s23, 1
      %p96 = por %p94, %p95
      %p98 = scmp.ne.s32.totalorder %s81, %s97
      %p99 = scmp.eq.s32.totalorder %s23, 0
      %p100 = por %p98, %p99
      %s101 = ssub.s32 %s24, %s36
      %p102 = scmp.eq.s32.totalorder %s101, 0
      %s104 = sadd.s32 %s103, 1
      %s105 = scalar_select %p102, %s103, %s104
      %p108 = pneg %p102
      %p109 = scmp.eq.s32.totalorder %s17, 1
      %p110 = por %p108, %p109
      %p111 = scmp.ne.s32.totalorder %s103, %s106
      %p112 = scmp.eq.s32.totalorder %s17, 0
      %p113 = por %p111, %p112
      %p114 = scmp.ne.s32.totalorder %s103, %s106
      %p115 = scmp.eq.s32.totalorder %s22, 1
      %p116 = por %p114, %p115
      %p117 = scmp.ne.s32.totalorder %s106, %s107
      %p118 = scmp.eq.s32.totalorder %s22, 0
      %p119 = por %p117, %p118
      %p120 = scmp.ne.s32.totalorder %s106, %s107
      %p121 = scmp.eq.s32.totalorder %s23, 1
      %p122 = por %p120, %p121
      %p124 = scmp.ne.s32.totalorder %s107, %s123
      %p125 = scmp.eq.s32.totalorder %s23, 0
      %p126 = por %p124, %p125
      %p127 = scmp.le.s32.totalorder 1, %s17
      %p128 = scmp.lt.s32.totalorder %s17, 3
      %p129 = pnand %p127, %p128
      %p130 = pneg %p129
      // Predicated region
      $region9: #{tpu_custom_call.1} parent=5 // pred_check
        _
      $region10: #{tpu_custom_call.1} parent=5 // pred_check_branch
        %132 = sbr.rel (%p129) target = $region12
      $region11: #{tpu_custom_call.1} parent=5 // pred_region
        %s133 = ssub.s32 %s17, 1
      $region12: #{tpu_custom_call.1} parent=5 // pred_fallthru
        _
      %p134 = scmp.lt.s32.totalorder %s17, 2
      // Predicated region
      $region13: #{tpu_custom_call.1} parent=5 // pred_check
        %p135 = pneg %p134
      $region14: #{tpu_custom_call.1} parent=5 // pred_check_branch
        %137 = sbr.rel (%p135) target = $region16
      $region15: #{tpu_custom_call.1} parent=5 // pred_region
        // Predicated region
        $region17: #{tpu_custom_call.1} parent=15 // pred_check
          %p138 = pneg %p55
        $region18: #{tpu_custom_call.1} parent=15 // pred_check_branch
          %140 = sbr.rel (%p138) target = $region20
        $region19: #{tpu_custom_call.1} parent=15 // pred_region
          %s141 = sand.u32 %s45, 1
          %s142 = scalar_lea.sflag [#allocation4], %s141
          %s143 = sand.u32 %s45, 1
          %s144 = smul.addr %s143, 16
          %s145 = scalar_lea.vmem [#allocation3], %s144
          %s146 = sadd.s32 %s24, %s25
          %p147 = scmp.lt.s32.totalorder %s146, 0
          %s148 = scalar_select %p147, %s146, 0
          %s149 = smul.u32 2, %s148
          %s151 = ssub.s32 256, 256
          %152 = vsyncadd %s142, %s151
          %s153 = smul.addr %s149, 128
          %s154 = scalar_lea.hbm %s0, %s153
          %s155 = sshll.u32 %s145, 4
          %s156 = int_to_ptr.vmem [resolvable:$true] %s155
          %161 = dma.hbm_to_vmem [thread:$0]  %s154, 256, %s156, %s142, 128, 128, 8
        $region20: #{tpu_custom_call.1} parent=15 // pred_fallthru
          _
        // Predicated region
        $region21: #{tpu_custom_call.1} parent=15 // pred_check
          %p162 = pneg %p87
        $region22: #{tpu_custom_call.1} parent=15 // pred_check_branch
          %164 = sbr.rel (%p162) target = $region24
        $region23: #{tpu_custom_call.1} parent=15 // pred_region
          %s165 = sand.u32 %s77, 1
          %s166 = scalar_lea.sflag [#allocation7], %s165
          %s167 = sand.u32 %s77, 1
          %s168 = smul.addr %s167, 16
          %s169 = scalar_lea.vmem [#allocation6], %s168
          %s170 = sadd.s32 %s24, %s25
          %p171 = scmp.lt.s32.totalorder %s170, 0
          %s172 = scalar_select %p171, %s170, 0
          %s173 = smul.u32 2, %s172
          %s175 = ssub.s32 256, 256
          %176 = vsyncadd %s166, %s175
          %s177 = smul.addr %s173, 128
          %s178 = scalar_lea.hbm %s1, %s177
          %s179 = sshll.u32 %s169, 4
          %s180 = int_to_ptr.vmem [resolvable:$true] %s179
          %185 = dma.hbm_to_vmem [thread:$0]  %s178, 256, %s180, %s166, 128, 128, 8
        $region24: #{tpu_custom_call.1} parent=15 // pred_fallthru
          _
      $region16: #{tpu_custom_call.1} parent=5 // pred_fallthru
        _
      %p186 = scmp.le.s32.totalorder 1, %s17
      %p187 = scmp.lt.s32.totalorder %s17, 3
      %p188 = pnand %p186, %p187
      %p189 = pneg %p188
      // Predicated region
      $region25: #{tpu_custom_call.1} parent=5 // pred_check
        _
      $region26: #{tpu_custom_call.1} parent=5 // pred_check_branch
        %191 = sbr.rel (%p188) target = $region28
      $region27: #{tpu_custom_call.1} parent=5 // pred_region
        %s192 = ssub.s32 %s17, 1
        %s193 = sand.u32 %s48, 1
        %s194 = scalar_lea.sflag [#allocation4], %s193
        %s195 = sand.u32 %s48, 1
        %s196 = smul.addr %s195, 16
        %s197 = scalar_lea.vmem [#allocation3], %s196
        // Predicated region
        $region29: #{tpu_custom_call.1} parent=27 // pred_check
          %p198 = pneg %p61
        $region30: #{tpu_custom_call.1} parent=27 // pred_check_branch
          %200 = sbr.rel (%p198) target = $region32
        $region31: #{tpu_custom_call.1} parent=27 // pred_region
          %201 = dma.done %s194, 256
        $region32: #{tpu_custom_call.1} parent=27 // pred_fallthru
          _
        %s202 = sand.u32 %s80, 1
        %s203 = scalar_lea.sflag [#allocation7], %s202
        %s204 = sand.u32 %s80, 1
        %s205 = smul.addr %s204, 16
        %s206 = scalar_lea.vmem [#allocation6], %s205
        // Predicated region
        $region33: #{tpu_custom_call.1} parent=27 // pred_check
          %p207 = pneg %p93
        $region34: #{tpu_custom_call.1} parent=27 // pred_check_branch
          %209 = sbr.rel (%p207) target = $region36
        $region35: #{tpu_custom_call.1} parent=27 // pred_region
          %210 = dma.done %s203, 256
        $region36: #{tpu_custom_call.1} parent=27 // pred_fallthru
          _
        %s211 = sand.u32 %s48, 1
        %s212 = scalar_lea.sflag [#allocation4], %s211
        %s213 = sand.u32 %s48, 1
        %s214 = smul.addr %s213, 16
        %s215 = scalar_lea.vmem [#allocation3], %s214
        %p216 = pneg %p61
        %p217 = pneg %p58
        %s218 = sand.u32 %s80, 1
        %s219 = scalar_lea.sflag [#allocation7], %s218
        %s220 = sand.u32 %s80, 1
        %s221 = smul.addr %s220, 16
        %s222 = scalar_lea.vmem [#allocation6], %s221
        %p223 = pneg %p93
        %p224 = pneg %p90
        %p225 = pneg %p119
        %p226 = pneg %p116
        %s227 = sand.u32 %s106, 1
        %s228 = scalar_lea.sflag [#allocation5], %s227
        %s229 = sand.u32 %s106, 1
        %s230 = smul.addr %s229, 8
        %s231 = scalar_lea.vmem [#allocation8], %s230
        %s232 = sadd.s32 %s26, %s27
        %p233 = scmp.lt.s32.totalorder %s232, 0
        %s234 = scalar_select %p233, %s232, 0
        %s235 = smul.u32 2, %s234
        %s236 = sadd.s32 %s26, %s27
        %p237 = scmp.lt.s32.totalorder %s236, 0
        %s238 = scalar_select %p237, %s236, 0
        %s239 = smul.u32 2, %s238
        %p240 = scmp.eq.s32.totalorder %s27, 0
        // Predicated region
        $region37: #{tpu_custom_call.1} parent=27 // pred_check
          %p241 = pneg %p240
        $region38: #{tpu_custom_call.1} parent=27 // pred_check_branch
          %243 = sbr.rel (%p241) target = $region40
        $region39: #{tpu_custom_call.1} parent=27 // pred_region
          %244 = vst [vmem:[#allocation2] sm:$0xff] 0.0
        $region40: #{tpu_custom_call.1} parent=27 // pred_fallthru
          _
        %v245 = vld [vmem:[%s197] sm:$0xff]
        %v246 = vld [vmem:[%s197 + $0x8] sm:$0xff]
        %v247 = vld [vmem:[%s206] sm:$0xff]
        %v248 = vld [vmem:[%s206 + $0x8] sm:$0xff]
        %v249 = vsub.f32 %v245, %v247
        %v250 = vsub.f32 %v246, %v248
        %v251 = vmul.f32 %v249, %v249
        %v252 = vmul.f32 %v250, %v250
        %s253 = sadd.s32 %s26, %s27
        %s254 = smul.u32 %s253, 16
        %s255 = sadd.s32 %s254, 16
        %p256 = scmp.gt.s32.totalorder %s255, 16
        // Predicated region
        $region41: #{tpu_custom_call.1} parent=27 // pred_check
          %p257 = pneg %p256
        $region42: #{tpu_custom_call.1} parent=27 // pred_check_branch
          %259 = sbr.rel (%p257) target = $region44
        $region43: #{tpu_custom_call.1} parent=27 // pred_region
          %v260 = vlaneseq
          %v261 = vshrl.u32 %v260, 7
          %v262 = vadd.s32 %v261, 8
          %v263 = vstv %s254
          %v264 = vadd.s32 %v261, %v263
          %v265 = vadd.s32 %v262, %v263
          %vm266 = vcmp.lt.s32.totalorder %v264, 16
          %vm267 = vcmp.lt.s32.totalorder %v265, 16
          %v268 = vsel %vm266, %v251, 0.0
          %v269 = vsel %vm267, %v252, 0.0
          %v270 = vld [vmem:[#allocation2] sm:$0xff]
          %v271 = vadd.f32 %v268, %v269
          %v272 = vadd.f32 %v270, %v271
          %273 = vst [vmem:[#allocation2] sm:$0xff] %v272
        $region44: #{tpu_custom_call.1} parent=27 // pred_fallthru
          _
        %p274 = scmp.le.s32.totalorder %s255, 16
        // Predicated region
        $region45: #{tpu_custom_call.1} parent=27 // pred_check
          %p275 = pneg %p274
        $region46: #{tpu_custom_call.1} parent=27 // pred_check_branch
          %277 = sbr.rel (%p275) target = $region48
        $region47: #{tpu_custom_call.1} parent=27 // pred_region
          %v278 = vld [vmem:[#allocation2] sm:$0xff]
          %v279 = vadd.f32 %v251, %v252
          %v280 = vadd.f32 %v278, %v279
          %281 = vst [vmem:[#allocation2] sm:$0xff] %v280
        $region48: #{tpu_custom_call.1} parent=27 // pred_fallthru
          _
        // Predicated region
        $region49: #{tpu_custom_call.1} parent=27 // pred_check
          %p282 = pneg %p240
        $region50: #{tpu_custom_call.1} parent=27 // pred_check_branch
          %284 = sbr.rel (%p282) target = $region52
        $region51: #{tpu_custom_call.1} parent=27 // pred_region
          %v285 = vld [vmem:[#allocation2] sm:$0xff]
          %286 = vst [vmem:[%s231] sm:$0xff] %v285
        $region52: #{tpu_custom_call.1} parent=27 // pred_fallthru
          _
        %s287 = sand.u32 %s106, 1
        %s288 = scalar_lea.sflag [#allocation5], %s287
        %s289 = sand.u32 %s106, 1
        %s290 = smul.addr %s289, 8
        %s291 = scalar_lea.vmem [#allocation8], %s290
        // Predicated region
        $region53: #{tpu_custom_call.1} parent=27 // pred_check
          %p292 = pneg %p116
        $region54: #{tpu_custom_call.1} parent=27 // pred_check_branch
          %294 = sbr.rel (%p292) target = $region56
        $region55: #{tpu_custom_call.1} parent=27 // pred_region
          %s296 = ssub.s32 128, 128
          %297 = vsyncadd %s288, %s296
          %s298 = smul.addr %s26, 128
          %s299 = scalar_lea.hbm %s2, %s298
          %s301 = sshll.u32 %s291, 4
          %s302 = int_to_ptr.vmem [resolvable:$true] %s301
          %304 = dma.vmem_to_hbm [thread:$0]  %s302, 128, %s299, %s288
        $region56: #{tpu_custom_call.1} parent=27 // pred_fallthru
          _
      $region28: #{tpu_custom_call.1} parent=5 // pred_fallthru
        _
      %p305 = scmp.le.s32.totalorder 2, %s17
      // Predicated region
      $region57: #{tpu_custom_call.1} parent=5 // pred_check
        %p306 = pneg %p305
      $region58: #{tpu_custom_call.1} parent=5 // pred_check_branch
        %308 = sbr.rel (%p306) target = $region60
      $region59: #{tpu_custom_call.1} parent=5 // pred_region
        %s309 = ssub.s32 %s17, 2
        // Predicated region
        $region61: #{tpu_custom_call.1} parent=59 // pred_check
          %p310 = pneg %p122
        $region62: #{tpu_custom_call.1} parent=59 // pred_check_branch
          %312 = sbr.rel (%p310) target = $region64
        $region63: #{tpu_custom_call.1} parent=59 // pred_region
          %s313 = sand.u32 %s107, 1
          %s314 = scalar_lea.sflag [#allocation5], %s313
          %s315 = sand.u32 %s107, 1
          %s316 = smul.addr %s315, 8
          %s317 = scalar_lea.vmem [#allocation8], %s316
          %318 = dma.done %s314, 128
        $region64: #{tpu_custom_call.1} parent=59 // pred_fallthru
          _
      $region60: #{tpu_custom_call.1} parent=5 // pred_fallthru
        _
    $region6: #{tpu_custom_call.1} parent=1 // loop_footer
      %s21 = sadd.s32 1, %s17
    $region7: #{tpu_custom_call.1} parent=1 // loop_footer_branch
      %16 = sbr.rel target = $region3
    $region8: #{tpu_custom_call.1} parent=1 // loop_exit
      _
    %319 = vsyncpa [#allocation4], 1
    %s320 = scalar_lea.sflag [#allocation4], 1
    %321 = vsyncpa %s320, 1
    %322 = vsyncpa [#allocation7], 1
    %s323 = scalar_lea.sflag [#allocation7], 1
    %324 = vsyncpa %s323, 1
    %325 = vsyncpa [#allocation5], 1
    %s326 = scalar_lea.sflag [#allocation5], 1
    %327 = vsyncpa %s326, 1

</llo_original>
